<compile_context>
chip_gen: v6e
topology: v6e:2x2x1
jax: 0.10.0
libtpu: 0.0.40
codegen_flags: <defaults>
</compile_context>

<pallas_src>
import functools

import jax
import jax.numpy as jnp
from jax import lax
from jax.experimental import pallas as pl
from jax.experimental.pallas import tpu as pltpu

WEIGHTED_LINES = 2
WEIGHTED_COF = 10.0

_SUBLANE = 32                      # row-tile granularity (covers f32/bf16/int8 tiling)
_VMEM_BUDGET = 16 * 1024 * 1024    # tile budget, conservative across v5e/v6e/v7x
_VMEM_LIMIT = 32 * 1024 * 1024     # explicit scoped-VMEM limit for the compiler
_MAX_TM = 1024                     # diminishing DMA-efficiency returns past ~512-1024 rows


def _round_up(x, m):
    return ((x + m - 1) // m) * m


def _choose_tm(M, WC, in_itemsize):
    """Largest row tile that keeps 2 inputs x 2 buffers + f32 accumulator in budget."""
    bytes_per_row = WC * (4 * in_itemsize + 4)
    tm = _VMEM_BUDGET // max(bytes_per_row, 1)
    tm = max(_SUBLANE, min(tm, _MAX_TM))
    tm = (tm // _SUBLANE) * _SUBLANE
    tm = min(tm, _round_up(M, _SUBLANE))   # don't exceed the (rounded) problem size
    return max(tm, _SUBLANE)


def _wmse_kernel(w_ref, pred_ref, targ_ref, out_ref, acc_ref, *,
                 M, tm, steps, mask_rows):
    """Accumulates sum(((pred - targ) * weight)^2) per shard; finalizes once."""
    c = pl.program_id(0)   # row-block shard (parallel; 2-way on multi-TC chips)
    i = pl.program_id(1)   # reduction steps within the shard (arbitrary)

    @pl.when(i == 0)
    def _():
        acc_ref[...] = jnp.zeros_like(acc_ref)

    pred = pred_ref[...].astype(jnp.float32)   # native-dtype tile, upcast in-kernel
    targ = targ_ref[...].astype(jnp.float32)
    d = (pred - targ) * w_ref[...]             # (1, WC) weight row broadcasts over rows
    if mask_rows:                              # static: only compiled in when M % tm != 0
        row0 = (c * steps + i) * tm
        rows = row0 + lax.broadcasted_iota(jnp.int32, d.shape, 0)
        d = jnp.where(rows < M, d, 0.0)        # zero out the padded tail rows
    acc_ref[...] += d * d                      # purely elementwise, hidden under DMA

    @pl.when(i == pl.num_programs(1) - 1)
    def _():
        total = jnp.sum(acc_ref[...])          # single cross-lane reduce per shard
        out_ref[...] = jnp.full(out_ref.shape, total, dtype=jnp.float32)


def rotor37_weight_loss(predicted, target):
    """JAX/Pallas port of Rotor37WeightLoss.forward (weighted MSE)."""
    # --- glue identical to the PyTorch module (plain JAX, not the hot path) ---
    if target.shape[1] > 4000:
        target = jnp.reshape(target, (target.shape[0], 64, 64, -1))
        predicted = jnp.reshape(predicted, (target.shape[0], 64, 64, -1))
    if target.ndim == 3:
        # TODO(synk): PyTorch only unsqueezes `predicted` here and relies on
        # expand_as quirks; we bring both to 4D so the kernel path is uniform.
        predicted = predicted[None, ...]
        target = target[None, ...]
    if target.ndim == 2:
        predicted = predicted[None, ..., None]
        target = target[None, ..., None]

    B, H, W, C = target.shape
    M = B * H
    WC = W * C
    n_total = float(M * WC)

    # Flatten: rows = (batch, grid_1), cols = (grid_2, channel). No dtype cast
    # here -- the kernel upcasts per tile (halves HBM traffic for bf16 inputs).
    pred2d = jnp.reshape(predicted, (M, WC))
    targ2d = jnp.reshape(target, (M, WC))

    # Precomputed, rescaled weight row over (grid_2, channel).
    scale = jnp.float32(
        W / (WEIGHTED_COF * WEIGHTED_LINES * 2 + W - WEIGHTED_LINES * 2))
    w_line = jnp.concatenate([
        jnp.full((WEIGHTED_LINES,), WEIGHTED_COF, jnp.float32),
        jnp.ones((W - 2 * WEIGHTED_LINES,), jnp.float32),
        jnp.full((WEIGHTED_LINES,), WEIGHTED_COF, jnp.float32),
    ]) * scale
    w_row = jnp.broadcast_to(w_line[:, None], (W, C)).reshape(1, WC)

    # TODO(synk): for extremely large W*C the column axis could be tiled too
    # (128-aligned tn, 2-D reduction grid); full-width rows are kept here since
    # the budgeted row tile already bounds the per-buffer footprint.
    tm = _choose_tm(M, WC, jnp.dtype(pred2d.dtype).itemsize)
    nb = pl.cdiv(M, tm)                     # number of row blocks
    # Shard row blocks over 2 TensorCores (v7x) when it divides evenly; on
    # 1-TC chips (v5e/v6e) the leading axis just runs sequentially.
    nc = 2 if (nb >= 2 and nb % 2 == 0) else 1
    steps = nb // nc
    mask_rows = (M % tm) != 0

    kernel = functools.partial(_wmse_kernel, M=M, tm=tm, steps=steps,
                               mask_rows=mask_rows)

    out = pl.pallas_call(
        kernel,
        out_shape=jax.ShapeDtypeStruct((nc * 8, 128), jnp.float32),
        grid=(nc, steps),
        in_specs=[
            pl.BlockSpec((1, WC), lambda c, i: (0, 0)),              # weight: resident
            pl.BlockSpec((tm, WC), lambda c, i: (c * steps + i, 0)),  # predicted
            pl.BlockSpec((tm, WC), lambda c, i: (c * steps + i, 0)),  # target
        ],
        # Lane-dense (8, 128) partial-sum block per shard.
        out_specs=pl.BlockSpec((8, 128), lambda c, i: (c, 0)),
        scratch_shapes=[pltpu.VMEM((tm, WC), jnp.float32)],
        compiler_params=pltpu.CompilerParams(
            dimension_semantics=("parallel", "arbitrary"),
            vmem_limit_bytes=_VMEM_LIMIT,
        ),
    )(w_row, pred2d, targ2d)

    partials = out[::8, 0]                  # one partial sum per shard
    return jnp.sum(partials) / jnp.float32(n_total)


def _reference_loss(predicted, target):
    """Pure-JAX reference mirroring the PyTorch forward (for a silent check)."""
    predicted = predicted.astype(jnp.float32)
    target = target.astype(jnp.float32)
    B, H, W, C = target.shape
    temp1 = jnp.ones((H, WEIGHTED_LINES), jnp.float32) * WEIGHTED_COF
    temp2 = jnp.ones((H, W - WEIGHTED_LINES * 2), jnp.float32)
    wmat = jnp.concatenate((temp1, temp2, temp1), axis=1)
    wmat = jnp.broadcast_to(wmat[None, :, :, None], target.shape)
    wmat = wmat * W / (WEIGHTED_COF * WEIGHTED_LINES * 2 + W - WEIGHTED_LINES * 2)
    diff = predicted * wmat - target * wmat
    return jnp.mean(diff * diff)


if __name__ == "__main__":
    key = jax.random.PRNGKey(0)
    k1, k2, k3, k4, k5, k6 = jax.random.split(key, 6)

    def _check(pred, targ, ref_pred, ref_targ, rtol=1e-5, atol=1e-6):
        loss = jax.block_until_ready(rotor37_weight_loss(pred, targ))
        ref = jax.block_until_ready(_reference_loss(ref_pred, ref_targ))
        assert jnp.allclose(loss, ref, rtol=rtol, atol=atol), (loss, ref)

    # Primary demo shape: (batch, grid_1, grid_2, channels) = (2, 16, 16, 4).
    B, H, W, C = 2, 16, 16, 4
    pred = jax.random.normal(k1, (B, H, W, C), dtype=jnp.float32)
    targ = jax.random.normal(k2, (B, H, W, C), dtype=jnp.float32)
    _check(pred, targ, pred, targ)

    # Ragged row count (exercises the masked tail tile).
    pred_r = jax.random.normal(k3, (3, 20, 16, 4), dtype=jnp.float32)
    targ_r = jax.random.normal(k4, (3, 20, 16, 4), dtype=jnp.float32)
    _check(pred_r, targ_r, pred_r, targ_r)

    # Native bf16 inputs (exercises the in-kernel upcast path).
    pred_b = pred.astype(jnp.bfloat16)
    targ_b = targ.astype(jnp.bfloat16)
    _check(pred_b, targ_b, pred_b, targ_b, rtol=1e-4, atol=1e-5)

    # Flat >4000-wide path (64x64 reshape) with enough rows for the 2-shard grid.
    pred_f = jax.random.normal(k5, (32, 64 * 64), dtype=jnp.float32)
    targ_f = jax.random.normal(k6, (32, 64 * 64), dtype=jnp.float32)
    _check(pred_f, targ_f,
           pred_f.reshape(32, 64, 64, 1), targ_f.reshape(32, 64, 64, 1))

    print("KERNEL_OK")
</pallas_src>

<mosaic_0001>
module attributes {stable_mosaic.version = 11 : i64} {
  func.func @_wmse_kernel(%arg0: i32, %arg1: i32, %arg2: memref<1x64xf32, #tpu.memory_space<vmem>>, %arg3: memref<32x64xf32, #tpu.memory_space<vmem>>, %arg4: memref<32x64xf32, #tpu.memory_space<vmem>>, %arg5: memref<8x128xf32, #tpu.memory_space<vmem>>, %arg6: memref<32x64xf32, #tpu.memory_space<vmem>>) attributes {dimension_semantics = [#tpu.dimension_semantics<parallel>, #tpu.dimension_semantics<arbitrary>], iteration_bounds = array<i64: 1, 1>, scalar_prefetch = 0 : i64, scratch_operands = 1 : i64, tpu.core_type = #tpu.core_type<tc>, window_params = [{pipeline_mode = #tpu.pipeline_mode<synchronous>, transform_indices = @transform_0, window_bounds = array<i64: 1, 64>}, {transform_indices = @transform_1, window_bounds = array<i64: 32, 64>}, {transform_indices = @transform_2, window_bounds = array<i64: 32, 64>}, {transform_indices = @transform_3, window_bounds = array<i64: 8, 128>}]} {
    %c0_i32 = arith.constant 0 : i32
    %0 = arith.cmpi eq, %arg1, %c0_i32 : i32
    %1 = arith.extui %0 : i1 to i32
    %c0_i32_0 = arith.constant 0 : i32
    %2 = arith.cmpi ne, %1, %c0_i32_0 : i32
    scf.if %2 {
      %cst = arith.constant 0.000000e+00 : f32
      %16 = vector.broadcast %cst : f32 to vector<32x64xf32>
      %c0_12 = arith.constant 0 : index
      %c0_13 = arith.constant 0 : index
      %17 = vector.load %arg6[%c0_12, %c0_13] : memref<32x64xf32, #tpu.memory_space<vmem>>, vector<32x64xf32>
      tpu.vector_store %arg6[%c0_12, %c0_13], %16 {strides = array<i32>} : memref<32x64xf32, #tpu.memory_space<vmem>>, vector<32x64xf32>,
    } else {
    }
    %c0 = arith.constant 0 : index
    %c0_1 = arith.constant 0 : index
    %3 = vector.load %arg3[%c0, %c0_1] : memref<32x64xf32, #tpu.memory_space<vmem>>, vector<32x64xf32>
    %c0_2 = arith.constant 0 : index
    %c0_3 = arith.constant 0 : index
    %4 = vector.load %arg4[%c0_2, %c0_3] : memref<32x64xf32, #tpu.memory_space<vmem>>, vector<32x64xf32>
    %5 = arith.subf %3, %4 : vector<32x64xf32>
    %c0_4 = arith.constant 0 : index
    %c0_5 = arith.constant 0 : index
    %6 = vector.load %arg2[%c0_4, %c0_5] : memref<1x64xf32, #tpu.memory_space<vmem>>, vector<1x64xf32>
    %7 = vector.broadcast %6 : vector<1x64xf32> to vector<32x64xf32>
    %8 = arith.mulf %5, %7 : vector<32x64xf32>
    %c0_6 = arith.constant 0 : index
    %c0_7 = arith.constant 0 : index
    %9 = vector.load %arg6[%c0_6, %c0_7] : memref<32x64xf32, #tpu.memory_space<vmem>>, vector<32x64xf32>
    %10 = arith.mulf %8, %8 : vector<32x64xf32>
    %11 = arith.addf %9, %10 : vector<32x64xf32>
    %c0_8 = arith.constant 0 : index
    %c0_9 = arith.constant 0 : index
    %12 = vector.load %arg6[%c0_8, %c0_9] : memref<32x64xf32, #tpu.memory_space<vmem>>, vector<32x64xf32>
    tpu.vector_store %arg6[%c0_8, %c0_9], %11 {strides = array<i32>} : memref<32x64xf32, #tpu.memory_space<vmem>>, vector<32x64xf32>,
    %c0_i32_10 = arith.constant 0 : i32
    %13 = arith.cmpi eq, %arg1, %c0_i32_10 : i32
    %14 = arith.extui %13 : i1 to i32
    %c0_i32_11 = arith.constant 0 : i32
    %15 = arith.cmpi ne, %14, %c0_i32_11 : i32
    scf.if %15 {
      %c0_12 = arith.constant 0 : index
      %c0_13 = arith.constant 0 : index
      %16 = vector.load %arg6[%c0_12, %c0_13] : memref<32x64xf32, #tpu.memory_space<vmem>>, vector<32x64xf32>
      %17 = vector.shape_cast %16 : vector<32x64xf32> to vector<1x32x64xf32>
      %cst = arith.constant dense<0.000000e+00> : vector<1xf32>
      %18 = vector.multi_reduction <add>, %17, %cst [1, 2] : vector<1x32x64xf32> to vector<1xf32>
      %19 = vector.shape_cast %18 : vector<1xf32> to vector<1x1x1xf32>
      %20 = vector.extract %19[0, 0, 0] : f32 from vector<1x1x1xf32>
      %21 = vector.broadcast %20 : f32 to vector<8x128xf32>
      %c0_14 = arith.constant 0 : index
      %c0_15 = arith.constant 0 : index
      %22 = vector.load %arg5[%c0_14, %c0_15] : memref<8x128xf32, #tpu.memory_space<vmem>>, vector<8x128xf32>
      tpu.vector_store %arg5[%c0_14, %c0_15], %21 {strides = array<i32>} : memref<8x128xf32, #tpu.memory_space<vmem>>, vector<8x128xf32>,
    } else {
    }
    return
  }
  func.func @transform_0(%arg0: i32, %arg1: i32) -> (i32, i32) {
    %c0_i32 = arith.constant 0 : i32
    %c0_i32_0 = arith.constant 0 : i32
    %c0_i32_1 = arith.constant 0 : i32
    return %c0_i32, %c0_i32_0 : i32, i32
  }
  func.func @transform_1(%arg0: i32, %arg1: i32) -> (i32, i32) {
    %c1_i32 = arith.constant 1 : i32
    %0 = arith.muli %arg0, %c1_i32 : i32
    %1 = arith.addi %0, %arg1 : i32
    %c0_i32 = arith.constant 0 : i32
    %c0_i32_0 = arith.constant 0 : i32
    return %1, %c0_i32 : i32, i32
  }
  func.func @transform_2(%arg0: i32, %arg1: i32) -> (i32, i32) {
    %c1_i32 = arith.constant 1 : i32
    %0 = arith.muli %arg0, %c1_i32 : i32
    %1 = arith.addi %0, %arg1 : i32
    %c0_i32 = arith.constant 0 : i32
    %c0_i32_0 = arith.constant 0 : i32
    return %1, %c0_i32 : i32, i32
  }
  func.func @transform_3(%arg0: i32, %arg1: i32) -> (i32, i32) {
    %c0_i32 = arith.constant 0 : i32
    %c0_i32_0 = arith.constant 0 : i32
    return %arg0, %c0_i32 : i32, i32
  }
}

</mosaic_0001>

<llo_original>
// kernel: tpu_custom_call.1
$region0: #{tpu_custom_call.1}
  #allocation0 [shape = 'u32[]', space=smem, size = 0x4, offset = 0x4, fixed_abs, tag = 'smem constant byte address 0x4 - core index']
  #allocation1 [shape = 'u32[144,128]{1,0:T(1,128)}', space=vmem, size = 0x12000, scoped, tag = 'internal scratch']
  #allocation2 [shape = 'f32[32,64]{1,0:T(8,128)}', space=vmem, size = 0x4000, scoped, tag = 'scratch operand']
  %s0 = inlined_call_operand.hbm [shape: f32[1,64], index: 0, kind: input, shape index: {}]
  %s1 = inlined_call_operand.hbm [shape: f32[32,64], index: 1, kind: input, shape index: {}]
  %s2 = inlined_call_operand.hbm [shape: f32[32,64], index: 2, kind: input, shape index: {}]
  %s3 = inlined_call_operand.hbm [shape: f32[8,128], index: 3, kind: output, shape index: {}]
  %s4 = sld [smem:[#allocation0]]
  $region42: #{tpu_custom_call.1} parent=0
    _
  %s6 = ssub.s32 1, %s4
  %s7 = scalar_select 0, %s6, %s4
  $region1: #{tpu_custom_call.1} parent=0
    #allocation3 [shape = 'u8[512]{0}', space=vmem, size = 0x400, scoped, tag = 'input window, operand 0, single buffered']
    #allocation4 [shape = 's32[1]{0}', space=sflag, size = 0x4, scoped, tag = 'scoped memory for tpu_custom_call.1']
    #allocation5 [shape = 's32[1]{0}', space=sflag, size = 0x4, scoped, tag = 'scoped memory for tpu_custom_call.1']
    #allocation6 [shape = 'u8[16384]{0}', space=vmem, size = 0x4000, scoped, tag = 'input window, operand 1, single buffered']
    #allocation7 [shape = 's32[1]{0}', space=sflag, size = 0x4, scoped, tag = 'scoped memory for tpu_custom_call.1']
    #allocation8 [shape = 'u8[16384]{0}', space=vmem, size = 0x4000, scoped, tag = 'input window, operand 2, single buffered']
    #allocation9 [shape = 'u8[4096]{0}', space=vmem, size = 0x1000, scoped, tag = 'output window, operand 0, single buffered']
    %8 = vsyncpa [#allocation4], 0
    %9 = vsyncpa [#allocation7], 0
    %10 = vsyncpa [#allocation5], 0
    // Predicated region
    $region2: #{tpu_custom_call.1} parent=1 // pred_check
      _
    $region3: #{tpu_custom_call.1} parent=1 // pred_check_branch
      %12 = sbr.rel (0) target = $region5
    $region4: #{tpu_custom_call.1} parent=1 // pred_region
      %s14 = ssub.s32 16, 16
      %15 = vsyncadd [#allocation4], %s14
      %s17 = sshll.u32 [#allocation3], 4
      %s18 = int_to_ptr.vmem [resolvable:$true] %s17
      %20 = dma.hbm_to_vmem [thread:$0]  %s0, 16, %s18, [#allocation4]
    $region5: #{tpu_custom_call.1} parent=1 // pred_fallthru
      _
    // Predicated region
    $region6: #{tpu_custom_call.1} parent=1 // pred_check
      _
    $region7: #{tpu_custom_call.1} parent=1 // pred_check_branch
      %22 = sbr.rel (0) target = $region9
    $region8: #{tpu_custom_call.1} parent=1 // pred_region
      %s23 = sadd.s32 0, 0
      %s24 = smul.u32 4, %s23
      %s26 = ssub.s32 512, 512
      %27 = vsyncadd [#allocation7], %s26
      %s28 = smul.addr %s24, 128
      %s29 = scalar_lea.hbm %s1, %s28
      %s30 = sshll.u32 [#allocation6], 4
      %s31 = int_to_ptr.vmem [resolvable:$true] %s30
      %36 = dma.hbm_to_vmem [thread:$0]  %s29, 512, %s31, [#allocation7], 128, 128, 8
    $region9: #{tpu_custom_call.1} parent=1 // pred_fallthru
      _
    // Predicated region
    $region10: #{tpu_custom_call.1} parent=1 // pred_check
      _
    $region11: #{tpu_custom_call.1} parent=1 // pred_check_branch
      %38 = sbr.rel (0) target = $region13
    $region12: #{tpu_custom_call.1} parent=1 // pred_region
      %s39 = sadd.s32 0, 0
      %s40 = smul.u32 4, %s39
      %s42 = ssub.s32 512, 512
      %43 = vsyncadd [#allocation7], %s42
      %s44 = smul.addr %s40, 128
      %s45 = scalar_lea.hbm %s2, %s44
      %s46 = sshll.u32 [#allocation8], 4
      %s47 = int_to_ptr.vmem [resolvable:$true] %s46
      %52 = dma.hbm_to_vmem [thread:$0]  %s45, 512, %s47, [#allocation7], 128, 128, 8
    $region13: #{tpu_custom_call.1} parent=1 // pred_fallthru
      _
    // Predicated region
    $region14: #{tpu_custom_call.1} parent=1 // pred_check
      _
    $region15: #{tpu_custom_call.1} parent=1 // pred_check_branch
      %54 = sbr.rel (0) target = $region17
    $region16: #{tpu_custom_call.1} parent=1 // pred_region
      %55 = dma.done [#allocation4], 16
    $region17: #{tpu_custom_call.1} parent=1 // pred_fallthru
      _
    // Predicated region
    $region18: #{tpu_custom_call.1} parent=1 // pred_check
      _
    $region19: #{tpu_custom_call.1} parent=1 // pred_check_branch
      %57 = sbr.rel (0) target = $region21
    $region20: #{tpu_custom_call.1} parent=1 // pred_region
      %58 = dma.done [#allocation7], 512
    $region21: #{tpu_custom_call.1} parent=1 // pred_fallthru
      _
    // Predicated region
    $region22: #{tpu_custom_call.1} parent=1 // pred_check
      _
    $region23: #{tpu_custom_call.1} parent=1 // pred_check_branch
      %60 = sbr.rel (0) target = $region25
    $region24: #{tpu_custom_call.1} parent=1 // pred_region
      %61 = dma.done [#allocation7], 512
    $region25: #{tpu_custom_call.1} parent=1 // pred_fallthru
      _
    %s62 = sadd.s32 0, 0
    %s63 = smul.u32 4, %s62
    %s64 = sadd.s32 0, 0
    %s65 = smul.u32 4, %s64
    %p66 = scmp.eq.s32.totalorder 0, 0
    // Predicated region
    $region26: #{tpu_custom_call.1} parent=1 // pred_check
      %p67 = pneg %p66
    $region27: #{tpu_custom_call.1} parent=1 // pred_check_branch
      %69 = sbr.rel (%p67) target = $region29
    $region28: #{tpu_custom_call.1} parent=1 // pred_region
      %vm70 = vcmask 523264
      %71 = vst.msk [vmem:[#allocation2] sm:$0xff] %vm70, 0.0
      %72 = vst.msk [vmem:[#allocation2 + $0x8] sm:$0xff] %vm70, 0.0
      %73 = vst.msk [vmem:[#allocation2 + $0x10] sm:$0xff] %vm70, 0.0
      %74 = vst.msk [vmem:[#allocation2 + $0x18] sm:$0xff] %vm70, 0.0
    $region29: #{tpu_custom_call.1} parent=1 // pred_fallthru
      _
    %v75 = vld [vmem:[#allocation6] sm:$0xff]
    %v76 = vld [vmem:[#allocation6 + $0x8] sm:$0xff]
    %v77 = vld [vmem:[#allocation6 + $0x10] sm:$0xff]
    %v78 = vld [vmem:[#allocation6 + $0x18] sm:$0xff]
    %v79 = vld [vmem:[#allocation8] sm:$0xff]
    %v80 = vld [vmem:[#allocation8 + $0x8] sm:$0xff]
    %v81 = vld [vmem:[#allocation8 + $0x10] sm:$0xff]
    %v82 = vld [vmem:[#allocation8 + $0x18] sm:$0xff]
    %v83 = vsub.f32 %v75, %v79
    %v84 = vsub.f32 %v76, %v80
    %v85 = vsub.f32 %v77, %v81
    %v86 = vsub.f32 %v78, %v82
    %v87 = vld [vmem:[#allocation3] sm:$0x1]
    %v89 = vlaneseq
    %v90 = vshrl.u32 %v89, 7
    %v91 = vsub.s32 0, %v90
    %v92 = vrot.slane %v87, %v91
    %v94 = vmul.f32 %v83, %v92
    %v95 = vmul.f32 %v84, %v92
    %v96 = vmul.f32 %v85, %v92
    %v97 = vmul.f32 %v86, %v92
    %v98 = vld [vmem:[#allocation2] sm:$0xff]
    %v99 = vld [vmem:[#allocation2 + $0x8] sm:$0xff]
    %v100 = vld [vmem:[#allocation2 + $0x10] sm:$0xff]
    %v101 = vld [vmem:[#allocation2 + $0x18] sm:$0xff]
    %v102 = vmul.f32 %v94, %v94
    %v103 = vmul.f32 %v95, %v95
    %v104 = vmul.f32 %v96, %v96
    %v105 = vmul.f32 %v97, %v97
    %v106 = vadd.f32 %v98, %v102
    %v107 = vadd.f32 %v99, %v103
    %v108 = vadd.f32 %v100, %v104
    %v109 = vadd.f32 %v101, %v105
    %vm110 = vcmask 523264
    %111 = vst.msk [vmem:[#allocation2] sm:$0xff] %vm110, %v106
    %112 = vst.msk [vmem:[#allocation2 + $0x8] sm:$0xff] %vm110, %v107
    %113 = vst.msk [vmem:[#allocation2 + $0x10] sm:$0xff] %vm110, %v108
    %114 = vst.msk [vmem:[#allocation2 + $0x18] sm:$0xff] %vm110, %v109
    // Predicated region
    $region30: #{tpu_custom_call.1} parent=1 // pred_check
      %p115 = pneg %p66
    $region31: #{tpu_custom_call.1} parent=1 // pred_check_branch
      %117 = sbr.rel (%p115) target = $region33
    $region32: #{tpu_custom_call.1} parent=1 // pred_region
      %v118 = vld [vmem:[#allocation2] sm:$0xff]
      %v119 = vld [vmem:[#allocation2 + $0x8] sm:$0xff]
      %v120 = vld [vmem:[#allocation2 + $0x10] sm:$0xff]
      %v121 = vld [vmem:[#allocation2 + $0x18] sm:$0xff]
      %v122 = vsel %vm110, %v118, 0.0
      %v123 = vsel %vm110, %v119, 0.0
      %v124 = vadd.f32 %v122, %v123
      %v125 = vsel %vm110, %v120, 0.0
      %v126 = vadd.f32 %v124, %v125
      %v127 = vsel %vm110, %v121, 0.0
      %v128 = vadd.f32 %v126, %v127
      %129 = vadd.xlane.f32.xlu0 %v128
      %v130 = vpop.xlane.xlu0 %129
      %v131 = vrot.slane %v130, 4
      %v132 = vadd.f32 %v130, %v131
      %v133 = vrot.slane %v132, 2
      %v134 = vadd.f32 %v132, %v133
      %v135 = vrot.slane %v134, 1
      %v136 = vadd.f32 %v134, %v135
      %s137 = vtos %v136
      %v138 = vstv %s137
      %139 = vst [vmem:[#allocation9] sm:$0xff] %v138
    $region33: #{tpu_custom_call.1} parent=1 // pred_fallthru
      _
    // Predicated region
    $region34: #{tpu_custom_call.1} parent=1 // pred_check
      _
    $region35: #{tpu_custom_call.1} parent=1 // pred_check_branch
      %141 = sbr.rel (0) target = $region37
    $region36: #{tpu_custom_call.1} parent=1 // pred_region
      %s143 = ssub.s32 128, 128
      %144 = vsyncadd [#allocation5], %s143
      %s146 = sshll.u32 [#allocation9], 4
      %s147 = int_to_ptr.vmem [resolvable:$true] %s146
      %149 = dma.vmem_to_hbm [thread:$0]  %s147, 128, %s3, [#allocation5]
    $region37: #{tpu_custom_call.1} parent=1 // pred_fallthru
      _
    // Predicated region
    $region38: #{tpu_custom_call.1} parent=1 // pred_check
      _
    $region39: #{tpu_custom_call.1} parent=1 // pred_check_branch
      %151 = sbr.rel (0) target = $region41
    $region40: #{tpu_custom_call.1} parent=1 // pred_region
      %152 = dma.done [#allocation5], 128
    $region41: #{tpu_custom_call.1} parent=1 // pred_fallthru
      _
    %153 = vsyncpa [#allocation4], 1
    %154 = vsyncpa [#allocation7], 1
    %155 = vsyncpa [#allocation5], 1

</llo_original>
